<compile_context>
chip_gen: v7x
topology: tpu7x:2x2x1
jax: 0.10.0
libtpu: 0.0.40
codegen_flags: <defaults>
</compile_context>

<pallas_src>
import jax
import jax.numpy as jnp
from jax.experimental import pallas as pl
from jax.experimental.pallas import tpu as pltpu


def _round_up(n: int, m: int) -> int:
    return (n + m - 1) // m * m


# -----------------------------------------------------------------------------
# Kernels
# -----------------------------------------------------------------------------
def _bottleneck_rsample_kernel(x_ref, wmu_ref, bmu_ref, wlv_ref, blv_ref,
                               eps_ref, z_ref):
    """z = mu + exp(logvar/2) * eps for one batch tile.

    x_ref:   [tb, in_f]
    wmu_ref: [in_f, out_f]   bmu_ref: [1, out_f]   (VMEM-resident)
    wlv_ref: [in_f, out_f]   blv_ref: [1, out_f]   (VMEM-resident)
    eps_ref: [tb, out_f]     z_ref:   [tb, out_f]
    """
    x = x_ref[...]
    mu = jnp.dot(x, wmu_ref[...], preferred_element_type=jnp.float32) + bmu_ref[...]
    logvar = jnp.dot(x, wlv_ref[...], preferred_element_type=jnp.float32) + blv_ref[...]
    std = jnp.exp(logvar * 0.5)
    z_ref[...] = (mu + std * eps_ref[...].astype(jnp.float32)).astype(z_ref.dtype)


def _bottleneck_mu_kernel(x_ref, wmu_ref, bmu_ref, z_ref):
    """Eval path (reparameterize=False): z = x @ W_mu + b_mu only."""
    mu = jnp.dot(x_ref[...], wmu_ref[...], preferred_element_type=jnp.float32)
    z_ref[...] = (mu + bmu_ref[...]).astype(z_ref.dtype)


# -----------------------------------------------------------------------------
# One-time parameter packing (torch layout -> transposed [in_f, out_f])
# -----------------------------------------------------------------------------
def make_bottleneck_params(w_mu, b_mu, w_logvar=None, b_logvar=None):
    """w_*: [out_f, in_f] (torch nn.Linear layout), b_*: [out_f]. Call once."""
    out_f, in_f = w_mu.shape
    params = {
        "in_f": in_f,
        "out_f": out_f,
        "w_mu": jnp.asarray(w_mu, jnp.float32).T,              # [in_f, out_f]
        "b_mu": jnp.asarray(b_mu, jnp.float32).reshape(1, -1),  # [1, out_f]
        "w_lv": None,
        "b_lv": None,
    }
    if w_logvar is not None:
        params["w_lv"] = jnp.asarray(w_logvar, jnp.float32).T
        params["b_lv"] = jnp.asarray(b_logvar, jnp.float32).reshape(1, -1)
    return params


# -----------------------------------------------------------------------------
# Helpers
# -----------------------------------------------------------------------------
def _pick_batch_tile(B: int):
    """Multiple-of-8 divisor of B, close to ~B/8 rows (>=4 steps/core on v7x),
    clamped to [128, 512]. Returns None if no such divisor exists."""
    target = min(512, max(128, _round_up(max(B // 8, 8), 8)))
    best = None
    t = 8
    while t <= min(512, B):
        if B % t == 0 and (best is None or abs(t - target) < abs(best - target)):
            best = t
        t += 8
    return best


def _vmem_ceiling_bytes() -> int:
    """Generation-aware VMEM ceiling: ~75% of physical, capped at 100 MiB
    (=> ~48 MiB on v7x's 64 MiB, ~96 MiB on v5e/v6e's 128 MiB)."""
    try:
        cap = int(pltpu.get_tpu_info().vmem_capacity_bytes)
        return min(int(cap * 0.75), 100 << 20)
    except Exception:
        return 48 << 20  # conservative default (safe for v7x)


# -----------------------------------------------------------------------------
# Forward
# -----------------------------------------------------------------------------
def bottleneck_forward(x, params, *, key=None, eps=None, reparameterize=True,
                       min_pallas_batch=64):
    """x: [B, in_f] -> z: [B, out_f].

    If reparameterize=True, eps ~ N(0,1) of shape [B, out_f] is either passed
    explicitly or drawn from `key`.
    """
    B, in_f = x.shape
    assert in_f == params["in_f"]
    out_f = params["out_f"]

    if reparameterize:
        assert params["w_lv"] is not None, "module built without logvar head"
        if eps is None:
            assert key is not None, "need `key` or `eps` for reparameterization"
            eps = jax.random.normal(key, (B, out_f), jnp.float32)

    # Tiny batches: a custom call + exposed DMAs cost more than the whole op.
    if B < min_pallas_batch:
        mu = x @ params["w_mu"] + params["b_mu"][0]
        if not reparameterize:
            return mu.astype(x.dtype)
        lv = x @ params["w_lv"] + params["b_lv"][0]
        return (mu + jnp.exp(lv * 0.5) * eps).astype(x.dtype)

    # ---- batch tiling: prefer a divisor of B (no jnp.pad pass over x) -------
    tb = _pick_batch_tile(B)
    b_pad = B
    if tb is None:  # rare fallback: pad the batch rows
        tb = min(512, max(128, _round_up(max(B // 8, 8), 8)))
        b_pad = _round_up(B, tb)
        x = jnp.pad(x, ((0, b_pad - B), (0, 0)))
        if reparameterize:
            eps = jnp.pad(eps, ((0, b_pad - B), (0, 0)))
    n_blocks = b_pad // tb

    if reparameterize:
        kernel = _bottleneck_rsample_kernel
        operands = (x, params["w_mu"], params["b_mu"],
                    params["w_lv"], params["b_lv"], eps)
        in_specs = [
            pl.BlockSpec((tb, in_f), lambda i: (i, 0)),       # x: tiled over batch
            pl.BlockSpec((in_f, out_f), lambda i: (0, 0)),    # w_mu: resident
            pl.BlockSpec((1, out_f), lambda i: (0, 0)),       # b_mu: resident
            pl.BlockSpec((in_f, out_f), lambda i: (0, 0)),    # w_logvar: resident
            pl.BlockSpec((1, out_f), lambda i: (0, 0)),       # b_logvar: resident
            pl.BlockSpec((tb, out_f), lambda i: (i, 0)),      # eps: tiled over batch
        ]
        n_heads = 2
    else:
        kernel = _bottleneck_mu_kernel
        operands = (x, params["w_mu"], params["b_mu"])
        in_specs = [
            pl.BlockSpec((tb, in_f), lambda i: (i, 0)),
            pl.BlockSpec((in_f, out_f), lambda i: (0, 0)),
            pl.BlockSpec((1, out_f), lambda i: (0, 0)),
        ]
        n_heads = 1
    out_spec = pl.BlockSpec((tb, out_f), lambda i: (i, 0))    # true width: no lane padding

    itemsize = jnp.dtype(x.dtype).itemsize
    # Double-buffered x / eps / z tiles + resident weights + f32 temps + slack.
    vmem_budget = (2 * tb * in_f * itemsize
                   + 2 * (n_heads + 1) * tb * out_f * 4
                   + 2 * n_heads * (in_f + 1) * out_f * 4
                   + 6 * tb * out_f * 4
                   + (4 << 20))
    vmem_limit = int(max(32 << 20, min(vmem_budget, _vmem_ceiling_bytes())))

    cost = pl.CostEstimate(
        flops=2 * b_pad * in_f * out_f * n_heads,
        transcendentals=(b_pad * out_f if reparameterize else 0),
        bytes_accessed=(b_pad * in_f * itemsize                      # x
                        + n_heads * (in_f + 1) * out_f * 4           # weights/bias
                        + (b_pad * out_f * 4 if reparameterize else 0)  # eps
                        + b_pad * out_f * itemsize),                 # z
    )

    z = pl.pallas_call(
        kernel,
        out_shape=jax.ShapeDtypeStruct((b_pad, out_f), x.dtype),
        grid_spec=pltpu.PrefetchScalarGridSpec(
            num_scalar_prefetch=0,
            grid=(n_blocks,),
            in_specs=in_specs,
            out_specs=out_spec,
        ),
        compiler_params=pltpu.CompilerParams(
            dimension_semantics=("parallel",),   # megacore sharding on v7x
            vmem_limit_bytes=vmem_limit,
        ),
        cost_estimate=cost,
    )(*operands)

    return z if b_pad == B else z[:B]


# -----------------------------------------------------------------------------
# Demo / correctness check
# -----------------------------------------------------------------------------
if __name__ == "__main__":
    B, IN_F, OUT_F = 1024, 32, 16   # small feature dims; batch gives an 8-step grid

    key = jax.random.PRNGKey(0)
    kx, kwm, kbm, kwl, kbl, keps = jax.random.split(key, 6)

    x = jax.random.normal(kx, (B, IN_F), jnp.float32)

    bound = 1.0 / (IN_F ** 0.5)     # torch.nn.Linear-like init
    w_mu = jax.random.uniform(kwm, (OUT_F, IN_F), jnp.float32, -bound, bound)
    b_mu = jax.random.uniform(kbm, (OUT_F,), jnp.float32, -bound, bound)
    w_lv = jax.random.uniform(kwl, (OUT_F, IN_F), jnp.float32, -bound, bound)
    b_lv = jax.random.uniform(kbl, (OUT_F,), jnp.float32, -bound, bound)

    params = make_bottleneck_params(w_mu, b_mu, w_lv, b_lv)   # packed once

    # --- reparameterize=True path: deterministic eps -> exact reference ---
    eps = jax.random.normal(keps, (B, OUT_F), jnp.float32)
    z = bottleneck_forward(x, params, eps=eps, reparameterize=True)
    z = jax.block_until_ready(z)

    mu_ref = x @ w_mu.T + b_mu
    lv_ref = x @ w_lv.T + b_lv
    z_ref = mu_ref + jnp.exp(lv_ref * 0.5) * eps
    assert z.shape == (B, OUT_F)
    assert bool(jnp.all(jnp.isfinite(z))), "non-finite output"
    assert jnp.allclose(z, z_ref, atol=1e-4, rtol=1e-4), "rsample path mismatch"

    # --- reparameterize=False path (mu-only kernel): exact check ---
    z_mu = bottleneck_forward(x, params, reparameterize=False)
    z_mu = jax.block_until_ready(z_mu)
    assert jnp.allclose(z_mu, mu_ref, atol=1e-4, rtol=1e-4), "mu path mismatch"

    print("KERNEL_OK")
</pallas_src>

<mosaic_0001>
module attributes {stable_mosaic.version = 11 : i64} {
  func.func @_bottleneck_rsample_kernel(%arg0: i32, %arg1: memref<128x32xf32, #tpu.memory_space<vmem>>, %arg2: memref<32x16xf32, #tpu.memory_space<vmem>>, %arg3: memref<1x16xf32, #tpu.memory_space<vmem>>, %arg4: memref<32x16xf32, #tpu.memory_space<vmem>>, %arg5: memref<1x16xf32, #tpu.memory_space<vmem>>, %arg6: memref<128x16xf32, #tpu.memory_space<vmem>>, %arg7: memref<128x16xf32, #tpu.memory_space<vmem>>) attributes {dimension_semantics = [#tpu.dimension_semantics<parallel>], iteration_bounds = array<i64: 8>, scalar_prefetch = 0 : i64, scratch_operands = 0 : i64, tpu.core_type = #tpu.core_type<tc>, window_params = [{transform_indices = @transform_0, window_bounds = array<i64: 128, 32>}, {pipeline_mode = #tpu.pipeline_mode<synchronous>, transform_indices = @transform_1, window_bounds = array<i64: 32, 16>}, {pipeline_mode = #tpu.pipeline_mode<synchronous>, transform_indices = @transform_2, window_bounds = array<i64: 1, 16>}, {pipeline_mode = #tpu.pipeline_mode<synchronous>, transform_indices = @transform_3, window_bounds = array<i64: 32, 16>}, {pipeline_mode = #tpu.pipeline_mode<synchronous>, transform_indices = @transform_4, window_bounds = array<i64: 1, 16>}, {transform_indices = @transform_5, window_bounds = array<i64: 128, 16>}, {transform_indices = @transform_6, window_bounds = array<i64: 128, 16>}]} {
    %c0 = arith.constant 0 : index
    %c0_0 = arith.constant 0 : index
    %0 = vector.load %arg1[%c0, %c0_0] : memref<128x32xf32, #tpu.memory_space<vmem>>, vector<128x32xf32>
    %c0_1 = arith.constant 0 : index
    %c0_2 = arith.constant 0 : index
    %1 = vector.load %arg2[%c0_1, %c0_2] : memref<32x16xf32, #tpu.memory_space<vmem>>, vector<32x16xf32>
    %cst = arith.constant dense<0.000000e+00> : vector<128x16xf32>
    %2 = tpu.matmul %0, %1, %cst {dimension_numbers = #tpu.dot_dimension_numbers<[1], [0], [0], [1], [0, 0, 1, 1], [], []>} : vector<128x32xf32>, vector<32x16xf32>, vector<128x16xf32> -> vector<128x16xf32>
    %c0_3 = arith.constant 0 : index
    %c0_4 = arith.constant 0 : index
    %3 = vector.load %arg3[%c0_3, %c0_4] : memref<1x16xf32, #tpu.memory_space<vmem>>, vector<1x16xf32>
    %4 = vector.broadcast %3 : vector<1x16xf32> to vector<128x16xf32>
    %5 = arith.addf %2, %4 : vector<128x16xf32>
    %c0_5 = arith.constant 0 : index
    %c0_6 = arith.constant 0 : index
    %6 = vector.load %arg4[%c0_5, %c0_6] : memref<32x16xf32, #tpu.memory_space<vmem>>, vector<32x16xf32>
    %cst_7 = arith.constant dense<0.000000e+00> : vector<128x16xf32>
    %7 = tpu.matmul %0, %6, %cst_7 {dimension_numbers = #tpu.dot_dimension_numbers<[1], [0], [0], [1], [0, 0, 1, 1], [], []>} : vector<128x32xf32>, vector<32x16xf32>, vector<128x16xf32> -> vector<128x16xf32>
    %c0_8 = arith.constant 0 : index
    %c0_9 = arith.constant 0 : index
    %8 = vector.load %arg5[%c0_8, %c0_9] : memref<1x16xf32, #tpu.memory_space<vmem>>, vector<1x16xf32>
    %9 = vector.broadcast %8 : vector<1x16xf32> to vector<128x16xf32>
    %10 = arith.addf %7, %9 : vector<128x16xf32>
    %cst_10 = arith.constant 5.000000e-01 : f32
    %11 = vector.broadcast %cst_10 : f32 to vector<128x16xf32>
    %12 = arith.mulf %10, %11 : vector<128x16xf32>
    %13 = math.exp %12 : vector<128x16xf32>
    %c0_11 = arith.constant 0 : index
    %c0_12 = arith.constant 0 : index
    %14 = vector.load %arg6[%c0_11, %c0_12] : memref<128x16xf32, #tpu.memory_space<vmem>>, vector<128x16xf32>
    %15 = arith.mulf %13, %14 : vector<128x16xf32>
    %16 = arith.addf %5, %15 : vector<128x16xf32>
    %c0_13 = arith.constant 0 : index
    %c0_14 = arith.constant 0 : index
    %17 = vector.load %arg7[%c0_13, %c0_14] : memref<128x16xf32, #tpu.memory_space<vmem>>, vector<128x16xf32>
    tpu.vector_store %arg7[%c0_13, %c0_14], %16 {strides = array<i32>} : memref<128x16xf32, #tpu.memory_space<vmem>>, vector<128x16xf32>,
    return
  }
  func.func @transform_0(%arg0: i32) -> (i32, i32) {
    %c0_i32 = arith.constant 0 : i32
    %c0_i32_0 = arith.constant 0 : i32
    return %arg0, %c0_i32 : i32, i32
  }
  func.func @transform_1(%arg0: i32) -> (i32, i32) {
    %c0_i32 = arith.constant 0 : i32
    %c0_i32_0 = arith.constant 0 : i32
    %c0_i32_1 = arith.constant 0 : i32
    return %c0_i32, %c0_i32_0 : i32, i32
  }
  func.func @transform_2(%arg0: i32) -> (i32, i32) {
    %c0_i32 = arith.constant 0 : i32
    %c0_i32_0 = arith.constant 0 : i32
    %c0_i32_1 = arith.constant 0 : i32
    return %c0_i32, %c0_i32_0 : i32, i32
  }
  func.func @transform_3(%arg0: i32) -> (i32, i32) {
    %c0_i32 = arith.constant 0 : i32
    %c0_i32_0 = arith.constant 0 : i32
    %c0_i32_1 = arith.constant 0 : i32
    return %c0_i32, %c0_i32_0 : i32, i32
  }
  func.func @transform_4(%arg0: i32) -> (i32, i32) {
    %c0_i32 = arith.constant 0 : i32
    %c0_i32_0 = arith.constant 0 : i32
    %c0_i32_1 = arith.constant 0 : i32
    return %c0_i32, %c0_i32_0 : i32, i32
  }
  func.func @transform_5(%arg0: i32) -> (i32, i32) {
    %c0_i32 = arith.constant 0 : i32
    %c0_i32_0 = arith.constant 0 : i32
    return %arg0, %c0_i32 : i32, i32
  }
  func.func @transform_6(%arg0: i32) -> (i32, i32) {
    %c0_i32 = arith.constant 0 : i32
    %c0_i32_0 = arith.constant 0 : i32
    return %arg0, %c0_i32 : i32, i32
  }
}

</mosaic_0001>

<llo_original>
// kernel: tpu_custom_call.1
$region0: #{tpu_custom_call.1}
  #allocation0 [shape = 'u32[]', space=smem, size = 0x4, offset = 0x4, fixed_abs, tag = 'smem constant byte address 0x4 - core index']
  #allocation1 [shape = 'u32[144,128]{1,0:T(1,128)}', space=vmem, size = 0x12000, scoped, tag = 'internal scratch']
  %s0 = inlined_call_operand.vmem [shape: f32[1024,32], index: 0, kind: input, shape index: {}]
  %s1 = inlined_call_operand.vmem [shape: f32[32,16], index: 1, kind: input, shape index: {}]
  %s2 = inlined_call_operand.vmem [shape: f32[1,16], index: 2, kind: input, shape index: {}]
  %s3 = inlined_call_operand.vmem [shape: f32[32,16], index: 3, kind: input, shape index: {}]
  %s4 = inlined_call_operand.vmem [shape: f32[1,16], index: 4, kind: input, shape index: {}]
  %s5 = inlined_call_operand.vmem [shape: f32[1024,16], index: 5, kind: input, shape index: {}]
  %s6 = inlined_call_operand.vmem [shape: f32[1024,16], index: 6, kind: output, shape index: {}]
  %s7 = sld [smem:[#allocation0]]
  $region57: #{tpu_custom_call.1} parent=0
    _
  %s9 = ssub.s32 1, %s7
  %s10 = scalar_select 0, %s9, %s7
  loop: start=0, step=1, limit=10
  $region2: #{tpu_custom_call.1} parent=0 // loop_pre_header
    _
  $region3: #{tpu_custom_call.1} parent=0 // loop_header
    %s12 = sphi 0, %s16
    %p13 = scmp.ge.s32.totalorder %s12, 10
    %s22 = sphi 0, %s24
    %s25 = sphi 0, %s22
    %s26 = sphi 0, %s25
    %s42 = sphi 0, %s26
    %s46 = sphi 0, %s46
    %s48 = sphi 0, %s46
    %s49 = sphi 0, %s48
    %s63 = sphi 0, %s49
    %s67 = sphi 0, %s67
    %s69 = sphi 0, %s67
    %s70 = sphi 0, %s69
    %s84 = sphi 0, %s70
    %s88 = sphi 0, %s88
    %s90 = sphi 0, %s88
    %s91 = sphi 0, %s90
    %s105 = sphi 0, %s91
    %s109 = sphi 0, %s109
    %s111 = sphi 0, %s109
    %s112 = sphi 0, %s111
    %s126 = sphi 0, %s112
    %s132 = sphi 0, %s134
    %s135 = sphi 0, %s132
    %s136 = sphi 0, %s135
    %s152 = sphi 0, %s136
    %s158 = sphi 0, %s160
    %s161 = sphi 0, %s158
    %s162 = sphi 0, %s161
    %s178 = sphi 0, %s162
  $region4: #{tpu_custom_call.1} parent=0 // loop_header_branch
    %15 = sbr.rel (%p13) target = $region8
  $region5: #{tpu_custom_call.1} parent=0 // loop_body
    %s17 = ssub.s32 %s12, 1
    %s18 = ssub.s32 %s12, 2
    %s19 = sadd.s32 %s12, 1
    %s20 = ssub.s32 %s12, %s19
    %p21 = scmp.eq.s32.totalorder %s20, 0
    %s23 = sadd.s32 %s22, 1
    %s24 = scalar_select %p21, %s22, %s23
    %p27 = pneg %p21
    %p28 = scmp.eq.s32.totalorder %s12, 7
    %p29 = por %p27, %p28
    %p30 = scmp.ne.s32.totalorder %s22, %s25
    %p31 = scmp.eq.s32.totalorder %s12, 0
    %p32 = por %p30, %p31
    %p33 = scmp.ne.s32.totalorder %s22, %s25
    %p34 = scmp.eq.s32.totalorder %s17, 7
    %p35 = por %p33, %p34
    %p36 = scmp.ne.s32.totalorder %s25, %s26
    %p37 = scmp.eq.s32.totalorder %s17, 0
    %p38 = por %p36, %p37
    %p39 = scmp.ne.s32.totalorder %s25, %s26
    %p40 = scmp.eq.s32.totalorder %s18, 7
    %p41 = por %p39, %p40
    %p43 = scmp.ne.s32.totalorder %s26, %s42
    %p44 = scmp.eq.s32.totalorder %s18, 0
    %p45 = por %p43, %p44
    %s47 = sadd.s32 %s46, 1
    %p50 = scmp.eq.s32.totalorder %s12, 7
    %p51 = scmp.ne.s32.totalorder %s46, %s48
    %p52 = scmp.eq.s32.totalorder %s12, 0
    %p53 = por %p51, %p52
    %p54 = scmp.ne.s32.totalorder %s46, %s48
    %p55 = scmp.eq.s32.totalorder %s17, 7
    %p56 = por %p54, %p55
    %p57 = scmp.ne.s32.totalorder %s48, %s49
    %p58 = scmp.eq.s32.totalorder %s17, 0
    %p59 = por %p57, %p58
    %p60 = scmp.ne.s32.totalorder %s48, %s49
    %p61 = scmp.eq.s32.totalorder %s18, 7
    %p62 = por %p60, %p61
    %p64 = scmp.ne.s32.totalorder %s49, %s63
    %p65 = scmp.eq.s32.totalorder %s18, 0
    %p66 = por %p64, %p65
    %s68 = sadd.s32 %s67, 1
    %p71 = scmp.eq.s32.totalorder %s12, 7
    %p72 = scmp.ne.s32.totalorder %s67, %s69
    %p73 = scmp.eq.s32.totalorder %s12, 0
    %p74 = por %p72, %p73
    %p75 = scmp.ne.s32.totalorder %s67, %s69
    %p76 = scmp.eq.s32.totalorder %s17, 7
    %p77 = por %p75, %p76
    %p78 = scmp.ne.s32.totalorder %s69, %s70
    %p79 = scmp.eq.s32.totalorder %s17, 0
    %p80 = por %p78, %p79
    %p81 = scmp.ne.s32.totalorder %s69, %s70
    %p82 = scmp.eq.s32.totalorder %s18, 7
    %p83 = por %p81, %p82
    %p85 = scmp.ne.s32.totalorder %s70, %s84
    %p86 = scmp.eq.s32.totalorder %s18, 0
    %p87 = por %p85, %p86
    %s89 = sadd.s32 %s88, 1
    %p92 = scmp.eq.s32.totalorder %s12, 7
    %p93 = scmp.ne.s32.totalorder %s88, %s90
    %p94 = scmp.eq.s32.totalorder %s12, 0
    %p95 = por %p93, %p94
    %p96 = scmp.ne.s32.totalorder %s88, %s90
    %p97 = scmp.eq.s32.totalorder %s17, 7
    %p98 = por %p96, %p97
    %p99 = scmp.ne.s32.totalorder %s90, %s91
    %p100 = scmp.eq.s32.totalorder %s17, 0
    %p101 = por %p99, %p100
    %p102 = scmp.ne.s32.totalorder %s90, %s91
    %p103 = scmp.eq.s32.totalorder %s18, 7
    %p104 = por %p102, %p103
    %p106 = scmp.ne.s32.totalorder %s91, %s105
    %p107 = scmp.eq.s32.totalorder %s18, 0
    %p108 = por %p106, %p107
    %s110 = sadd.s32 %s109, 1
    %p113 = scmp.eq.s32.totalorder %s12, 7
    %p114 = scmp.ne.s32.totalorder %s109, %s111
    %p115 = scmp.eq.s32.totalorder %s12, 0
    %p116 = por %p114, %p115
    %p117 = scmp.ne.s32.totalorder %s109, %s111
    %p118 = scmp.eq.s32.totalorder %s17, 7
    %p119 = por %p117, %p118
    %p120 = scmp.ne.s32.totalorder %s111, %s112
    %p121 = scmp.eq.s32.totalorder %s17, 0
    %p122 = por %p120, %p121
    %p123 = scmp.ne.s32.totalorder %s111, %s112
    %p124 = scmp.eq.s32.totalorder %s18, 7
    %p125 = por %p123, %p124
    %p127 = scmp.ne.s32.totalorder %s112, %s126
    %p128 = scmp.eq.s32.totalorder %s18, 0
    %p129 = por %p127, %p128
    %s130 = ssub.s32 %s12, %s19
    %p131 = scmp.eq.s32.totalorder %s130, 0
    %s133 = sadd.s32 %s132, 1
    %s134 = scalar_select %p131, %s132, %s133
    %p137 = pneg %p131
    %p138 = scmp.eq.s32.totalorder %s12, 7
    %p139 = por %p137, %p138
    %p140 = scmp.ne.s32.totalorder %s132, %s135
    %p141 = scmp.eq.s32.totalorder %s12, 0
    %p142 = por %p140, %p141
    %p143 = scmp.ne.s32.totalorder %s132, %s135
    %p144 = scmp.eq.s32.totalorder %s17, 7
    %p145 = por %p143, %p144
    %p146 = scmp.ne.s32.totalorder %s135, %s136
    %p147 = scmp.eq.s32.totalorder %s17, 0
    %p148 = por %p146, %p147
    %p149 = scmp.ne.s32.totalorder %s135, %s136
    %p150 = scmp.eq.s32.totalorder %s18, 7
    %p151 = por %p149, %p150
    %p153 = scmp.ne.s32.totalorder %s136, %s152
    %p154 = scmp.eq.s32.totalorder %s18, 0
    %p155 = por %p153, %p154
    %s156 = ssub.s32 %s12, %s19
    %p157 = scmp.eq.s32.totalorder %s156, 0
    %s159 = sadd.s32 %s158, 1
    %s160 = scalar_select %p157, %s158, %s159
    %p163 = pneg %p157
    %p164 = scmp.eq.s32.totalorder %s12, 7
    %p165 = por %p163, %p164
    %p166 = scmp.ne.s32.totalorder %s158, %s161
    %p167 = scmp.eq.s32.totalorder %s12, 0
    %p168 = por %p166, %p167
    %p169 = scmp.ne.s32.totalorder %s158, %s161
    %p170 = scmp.eq.s32.totalorder %s17, 7
    %p171 = por %p169, %p170
    %p172 = scmp.ne.s32.totalorder %s161, %s162
    %p173 = scmp.eq.s32.totalorder %s17, 0
    %p174 = por %p172, %p173
    %p175 = scmp.ne.s32.totalorder %s161, %s162
    %p176 = scmp.eq.s32.totalorder %s18, 7
    %p177 = por %p175, %p176
    %p179 = scmp.ne.s32.totalorder %s162, %s178
    %p180 = scmp.eq.s32.totalorder %s18, 0
    %p181 = por %p179, %p180
    %p182 = scmp.le.s32.totalorder 1, %s12
    %p183 = scmp.lt.s32.totalorder %s12, 9
    %p184 = pnand %p182, %p183
    %p185 = pneg %p184
    // Predicated region
    $region9: #{tpu_custom_call.1} parent=5 // pred_check
      _
    $region10: #{tpu_custom_call.1} parent=5 // pred_check_branch
      %187 = sbr.rel (%p184) target = $region12
    $region11: #{tpu_custom_call.1} parent=5 // pred_region
      %s188 = ssub.s32 %s12, 1
      // Predicated region
      $region13: #{tpu_custom_call.1} parent=11 // pred_check
        %p189 = pneg %p59
      $region14: #{tpu_custom_call.1} parent=11 // pred_check_branch
        %191 = sbr.rel (%p189) target = $region16
      $region15: #{tpu_custom_call.1} parent=11 // pred_region
        _
      $region16: #{tpu_custom_call.1} parent=11 // pred_fallthru
        _
      // Predicated region
      $region17: #{tpu_custom_call.1} parent=11 // pred_check
        %p192 = pneg %p80
      $region18: #{tpu_custom_call.1} parent=11 // pred_check_branch
        %194 = sbr.rel (%p192) target = $region20
      $region19: #{tpu_custom_call.1} parent=11 // pred_region
        _
      $region20: #{tpu_custom_call.1} parent=11 // pred_fallthru
        _
      // Predicated region
      $region21: #{tpu_custom_call.1} parent=11 // pred_check
        %p195 = pneg %p101
      $region22: #{tpu_custom_call.1} parent=11 // pred_check_branch
        %197 = sbr.rel (%p195) target = $region24
      $region23: #{tpu_custom_call.1} parent=11 // pred_region
        _
      $region24: #{tpu_custom_call.1} parent=11 // pred_fallthru
        _
      // Predicated region
      $region25: #{tpu_custom_call.1} parent=11 // pred_check
        %p198 = pneg %p122
      $region26: #{tpu_custom_call.1} parent=11 // pred_check_branch
        %200 = sbr.rel (%p198) target = $region28
      $region27: #{tpu_custom_call.1} parent=11 // pred_region
        _
      $region28: #{tpu_custom_call.1} parent=11 // pred_fallthru
        _
    $region12: #{tpu_custom_call.1} parent=5 // pred_fallthru
      _
    %p201 = scmp.lt.s32.totalorder %s12, 8
    // Predicated region
    $region29: #{tpu_custom_call.1} parent=5 // pred_check
      %p202 = pneg %p201
    $region30: #{tpu_custom_call.1} parent=5 // pred_check_branch
      %204 = sbr.rel (%p202) target = $region32
    $region31: #{tpu_custom_call.1} parent=5 // pred_region
      // Predicated region
      $region33: #{tpu_custom_call.1} parent=31 // pred_check
        %p205 = pneg %p32
      $region34: #{tpu_custom_call.1} parent=31 // pred_check_branch
        %207 = sbr.rel (%p205) target = $region36
      $region35: #{tpu_custom_call.1} parent=31 // pred_region
        %s208 = smul.u32 16, %s12
        %p209 = scmp.lt.s32.totalorder %s208, 127
        %s210 = scalar_select %p209, %s208, 127
        %s211 = smul.addr %s210, 8
        %s212 = scalar_lea.vmem %s0, %s211
        %s213 = smul.u32 16, %s12
      $region36: #{tpu_custom_call.1} parent=31 // pred_fallthru
        _
      // Predicated region
      $region37: #{tpu_custom_call.1} parent=31 // pred_check
        %p214 = pneg %p142
      $region38: #{tpu_custom_call.1} parent=31 // pred_check_branch
        %216 = sbr.rel (%p214) target = $region40
      $region39: #{tpu_custom_call.1} parent=31 // pred_region
        %s217 = smul.u32 16, %s12
        %p218 = scmp.lt.s32.totalorder %s217, 127
        %s219 = scalar_select %p218, %s217, 127
        %s220 = smul.addr %s219, 8
        %s221 = scalar_lea.vmem %s5, %s220
        %s222 = smul.u32 16, %s12
      $region40: #{tpu_custom_call.1} parent=31 // pred_fallthru
        _
    $region32: #{tpu_custom_call.1} parent=5 // pred_fallthru
      _
    %p223 = scmp.le.s32.totalorder 1, %s12
    %p224 = scmp.lt.s32.totalorder %s12, 9
    %p225 = pnand %p223, %p224
    %p226 = pneg %p225
    // Predicated region
    $region41: #{tpu_custom_call.1} parent=5 // pred_check
      _
    $region42: #{tpu_custom_call.1} parent=5 // pred_check_branch
      %228 = sbr.rel (%p225) target = $region44
    $region43: #{tpu_custom_call.1} parent=5 // pred_region
      %s229 = ssub.s32 %s12, 1
      %s230 = smul.u32 16, %s17
      %p231 = scmp.lt.s32.totalorder %s230, 127
      %s232 = scalar_select %p231, %s230, 127
      %s233 = smul.addr %s232, 8
      %s234 = scalar_lea.vmem %s0, %s233
      %p235 = pneg %p38
      %p236 = pneg %p35
      %p237 = pneg %p59
      %p238 = pneg %p56
      %p239 = pneg %p80
      %p240 = pneg %p77
      %p241 = pneg %p101
      %p242 = pneg %p98
      %p243 = pneg %p122
      %p244 = pneg %p119
      %s245 = smul.u32 16, %s17
      %p246 = scmp.lt.s32.totalorder %s245, 127
      %s247 = scalar_select %p246, %s245, 127
      %s248 = smul.addr %s247, 8
      %s249 = scalar_lea.vmem %s5, %s248
      %p250 = pneg %p148
      %p251 = pneg %p145
      %p252 = pneg %p174
      %p253 = pneg %p171
      %s254 = smul.u32 16, %s17
      %p255 = scmp.lt.s32.totalorder %s254, 127
      %s256 = scalar_select %p255, %s254, 127
      %s257 = smul.addr %s256, 8
      %s258 = scalar_lea.vmem %s6, %s257
      %s259 = smul.u32 16, %s17
      %p260 = scmp.lt.s32.totalorder %s259, 127
      %s261 = scalar_select %p260, %s259, 127
      %s262 = smul.addr %s261, 8
      %s263 = scalar_lea.vmem %s0, %s262
      %s264 = smul.u32 16, %s17
      %s265 = smul.u32 16, %s17
      %p266 = scmp.lt.s32.totalorder %s265, 127
      %s267 = scalar_select %p266, %s265, 127
      %s268 = smul.addr %s267, 8
      %s269 = scalar_lea.vmem %s5, %s268
      %s270 = smul.u32 16, %s17
      %s271 = smul.u32 16, %s17
      %p272 = scmp.lt.s32.totalorder %s271, 127
      %s273 = scalar_select %p272, %s271, 127
      %s274 = smul.addr %s273, 8
      %s275 = scalar_lea.vmem %s6, %s274
      %s276 = smul.u32 16, %s17
      %v277 = vld [vmem:[%s263] sm:$0xff]
      %v278 = vld [vmem:[%s263 + $0x8] sm:$0xff]
      %v279 = vld [vmem:[%s263 + $0x10] sm:$0xff]
      %v280 = vld [vmem:[%s263 + $0x18] sm:$0xff]
      %v281 = vld [vmem:[%s263 + $0x20] sm:$0xff]
      %v282 = vld [vmem:[%s263 + $0x28] sm:$0xff]
      %v283 = vld [vmem:[%s263 + $0x30] sm:$0xff]
      %v284 = vld [vmem:[%s263 + $0x38] sm:$0xff]
      %v285 = vld [vmem:[%s263 + $0x40] sm:$0xff]
      %v286 = vld [vmem:[%s263 + $0x48] sm:$0xff]
      %v287 = vld [vmem:[%s263 + $0x50] sm:$0xff]
      %v288 = vld [vmem:[%s263 + $0x58] sm:$0xff]
      %v289 = vld [vmem:[%s263 + $0x60] sm:$0xff]
      %v290 = vld [vmem:[%s263 + $0x68] sm:$0xff]
      %v291 = vld [vmem:[%s263 + $0x70] sm:$0xff]
      %v292 = vld [vmem:[%s263 + $0x78] sm:$0xff]
      %v293 = vld [vmem:[%s1] sm:$0xff]
      %v294 = vld [vmem:[%s1 + $0x8] sm:$0xff]
      %v295 = vld [vmem:[%s1 + $0x10] sm:$0xff]
      %v296 = vld [vmem:[%s1 + $0x18] sm:$0xff]
      %v297 = vld [vmem:[%s2] sm:$0x1]
      %v299 = vlaneseq
      %v300 = vshrl.u32 %v299, 7
      %v301 = vsub.s32 0, %v300
      %v302 = vrot.slane %v297, %v301
      %vm304 = vcmask 261120
      %v306 = vsel %vm304, %v277, 0
      %v309 = vsel %vm304, %v278, 0
      %v312 = vsel %vm304, %v279, 0
      %v315 = vsel %vm304, %v280, 0
      %v318 = vsel %vm304, %v281, 0
      %v321 = vsel %vm304, %v282, 0
      %v324 = vsel %vm304, %v283, 0
      %v327 = vsel %vm304, %v284, 0
      %v330 = vsel %vm304, %v285, 0
      %v333 = vsel %vm304, %v286, 0
      %v336 = vsel %vm304, %v287, 0
      %v339 = vsel %vm304, %v288, 0
      %v342 = vsel %vm304, %v289, 0
      %v345 = vsel %vm304, %v290, 0
      %v348 = vsel %vm304, %v291, 0
      %v351 = vsel %vm304, %v292, 0
      %353 = vmatprep.subr.mxu0 0.0
      %354 = vmatpush1.msra.mxu0 %v293
      %355 = vmatprep.subr.mxu0 0.0
      %356 = vmatpush1.msra.mxu0 %v294
      %357 = vmatprep.subr.mxu0 0.0
      %358 = vmatpush1.msra.mxu0 %v295
      %359 = vmatprep.subr.mxu0 0.0
      %360 = vmatpush1.msra.mxu0 %v296
      %361 = vmatprep.subr.mxu0 0.0
      %362 = vmatpush1.msra.mxu0 0.0
      %363 = vmatprep.subr.mxu0 0.0
      %364 = vmatpush1.msra.mxu0 0.0
      %365 = vmatprep.subr.mxu0 0.0
      %366 = vmatpush1.msra.mxu0 0.0
      %367 = vmatprep.subr.mxu0 0.0
      %368 = vmatpush1.msra.mxu0 0.0
      %369 = vmatprep.subr.mxu0 0.0
      %370 = vmatpush1.msra.mxu0 0.0
      %371 = vmatprep.subr.mxu0 0.0
      %372 = vmatpush1.msra.mxu0 0.0
      %373 = vmatprep.subr.mxu0 0.0
      %374 = vmatpush1.msra.mxu0 0.0
      %375 = vmatprep.subr.mxu0 0.0
      %376 = vmatpush1.msra.mxu0 0.0
      %377 = vmatprep.subr.mxu0 0.0
      %378 = vmatpush1.msra.mxu0 0.0
      %379 = vmatprep.subr.mxu0 0.0
      %380 = vmatpush1.msra.mxu0 0.0
      %381 = vmatprep.subr.mxu0 0.0
      %382 = vmatpush1.msra.mxu0 0.0
      %383 = vmatprep.subr.mxu0 0.0
      %384 = vmatpush1.msra.mxu0 0.0
      %385 = vmatprep.subr.mxu0 0.0
      %386 = vmatpush1.msra.mxu0 0.0
      %387 = vmatprep.subr.mxu0 0.0
      %388 = vmatpush1.msra.mxu0 0.0
      %389 = vmatprep.subr.mxu0 0.0
      %390 = vmatpush1.msra.mxu0 0.0
      %391 = vmatprep.subr.mxu0 0.0
      %392 = vmatpush1.msra.mxu0 0.0
      %393 = vmatprep.subr.mxu0 0.0
      %394 = vmatpush1.msra.mxu0 0.0
      %395 = vmatprep.subr.mxu0 0.0
      %396 = vmatpush1.msra.mxu0 0.0
      %397 = vmatprep.subr.mxu0 0.0
      %398 = vmatpush1.msra.mxu0 0.0
      %399 = vmatprep.subr.mxu0 0.0
      %400 = vmatpush1.msra.mxu0 0.0
      %401 = vmatprep.subr.mxu0 0.0
      %402 = vmatpush1.msra.mxu0 0.0
      %403 = vmatprep.subr.mxu0 0.0
      %404 = vmatpush1.msra.mxu0 0.0
      %405 = vmatprep.subr.mxu0 0.0
      %406 = vmatpush1.msra.mxu0 0.0
      %407 = vmatprep.subr.mxu0 0.0
      %408 = vmatpush1.msra.mxu0 0.0
      %409 = vmatprep.subr.mxu0 0.0
      %410 = vmatpush1.msra.mxu0 0.0
      %411 = vmatprep.subr.mxu0 0.0
      %412 = vmatpush1.msra.mxu0 0.0
      %413 = vmatprep.subr.mxu0 0.0
      %414 = vmatpush1.msra.mxu0 0.0
      %415 = vmatprep.subr.mxu0 0.0
      %416 = vmatpush1.msra.mxu0 0.0
      %417 = vmatprep.mubr.f32.mxu0 0.0
      %418 = vmatmul.mubr.f32.gmra.mrb[0].mxu0 %v306
      %v419 = vpop.f32.mrb[0].mxu0
      %v420 = vadd.f32 %v302, %v419
      %v421 = vpop.f32.mrb[0].mxu0
      %422 = vmatprep.mubr.f32.mxu0 0.0
      %423 = vmatmul.mubr.f32.gmra.mrb[0].mxu0 %v309
      %v424 = vpop.f32.mrb[0].mxu0
      %v425 = vadd.f32 %v302, %v424
      %v426 = vpop.f32.mrb[0].mxu0
      %427 = vmatprep.mubr.f32.mxu0 0.0
      %428 = vmatmul.mubr.f32.gmra.mrb[0].mxu0 %v312
      %v429 = vpop.f32.mrb[0].mxu0
      %v430 = vadd.f32 %v302, %v429
      %v431 = vpop.f32.mrb[0].mxu0
      %432 = vmatprep.mubr.f32.mxu0 0.0
      %433 = vmatmul.mubr.f32.gmra.mrb[0].mxu0 %v315
      %v434 = vpop.f32.mrb[0].mxu0
      %v435 = vadd.f32 %v302, %v434
      %v436 = vpop.f32.mrb[0].mxu0
      %437 = vmatprep.mubr.f32.mxu0 0.0
      %438 = vmatmul.mubr.f32.gmra.mrb[0].mxu0 %v318
      %v439 = vpop.f32.mrb[0].mxu0
      %v440 = vadd.f32 %v302, %v439
      %v441 = vpop.f32.mrb[0].mxu0
      %442 = vmatprep.mubr.f32.mxu0 0.0
      %443 = vmatmul.mubr.f32.gmra.mrb[0].mxu0 %v321
      %v444 = vpop.f32.mrb[0].mxu0
      %v445 = vadd.f32 %v302, %v444
      %v446 = vpop.f32.mrb[0].mxu0
      %447 = vmatprep.mubr.f32.mxu0 0.0
      %448 = vmatmul.mubr.f32.gmra.mrb[0].mxu0 %v324
      %v449 = vpop.f32.mrb[0].mxu0
      %v450 = vadd.f32 %v302, %v449
      %v451 = vpop.f32.mrb[0].mxu0
      %452 = vmatprep.mubr.f32.mxu0 0.0
      %453 = vmatmul.mubr.f32.gmra.mrb[0].mxu0 %v327
      %v454 = vpop.f32.mrb[0].mxu0
      %v455 = vadd.f32 %v302, %v454
      %v456 = vpop.f32.mrb[0].mxu0
      %457 = vmatprep.mubr.f32.mxu0 0.0
      %458 = vmatmul.mubr.f32.gmra.mrb[0].mxu0 %v330
      %v459 = vpop.f32.mrb[0].mxu0
      %v460 = vadd.f32 %v302, %v459
      %v461 = vpop.f32.mrb[0].mxu0
      %462 = vmatprep.mubr.f32.mxu0 0.0
      %463 = vmatmul.mubr.f32.gmra.mrb[0].mxu0 %v333
      %v464 = vpop.f32.mrb[0].mxu0
      %v465 = vadd.f32 %v302, %v464
      %v466 = vpop.f32.mrb[0].mxu0
      %467 = vmatprep.mubr.f32.mxu0 0.0
      %468 = vmatmul.mubr.f32.gmra.mrb[0].mxu0 %v336
      %v469 = vpop.f32.mrb[0].mxu0
      %v470 = vadd.f32 %v302, %v469
      %v471 = vpop.f32.mrb[0].mxu0
      %472 = vmatprep.mubr.f32.mxu0 0.0
      %473 = vmatmul.mubr.f32.gmra.mrb[0].mxu0 %v339
      %v474 = vpop.f32.mrb[0].mxu0
      %v475 = vadd.f32 %v302, %v474
      %v476 = vpop.f32.mrb[0].mxu0
      %477 = vmatprep.mubr.f32.mxu0 0.0
      %478 = vmatmul.mubr.f32.gmra.mrb[0].mxu0 %v342
      %v479 = vpop.f32.mrb[0].mxu0
      %v480 = vadd.f32 %v302, %v479
      %v481 = vpop.f32.mrb[0].mxu0
      %482 = vmatprep.mubr.f32.mxu0 0.0
      %483 = vmatmul.mubr.f32.gmra.mrb[0].mxu0 %v345
      %v484 = vpop.f32.mrb[0].mxu0
      %v485 = vadd.f32 %v302, %v484
      %v486 = vpop.f32.mrb[0].mxu0
      %487 = vmatprep.mubr.f32.mxu0 0.0
      %488 = vmatmul.mubr.f32.gmra.mrb[0].mxu0 %v348
      %v489 = vpop.f32.mrb[0].mxu0
      %v490 = vadd.f32 %v302, %v489
      %v491 = vpop.f32.mrb[0].mxu0
      %492 = vmatprep.mubr.f32.mxu0 0.0
      %493 = vmatmul.mubr.f32.gmra.mrb[0].mxu0 %v351
      %v494 = vpop.f32.mrb[0].mxu0
      %v495 = vadd.f32 %v302, %v494
      %v496 = vpop.f32.mrb[0].mxu0
      %497 = vdwg.mxu0
      %v498 = vld [vmem:[%s3] sm:$0xff]
      %v499 = vld [vmem:[%s3 + $0x8] sm:$0xff]
      %v500 = vld [vmem:[%s3 + $0x10] sm:$0xff]
      %v501 = vld [vmem:[%s3 + $0x18] sm:$0xff]
      %v502 = vld [vmem:[%s4] sm:$0x1]
      %v504 = vlaneseq
      %v505 = vshrl.u32 %v504, 7
      %v506 = vsub.s32 0, %v505
      %v507 = vrot.slane %v502, %v506
      %509 = vmatprep.subr.mxu0 0.0
      %510 = vmatpush1.msra.mxu0 %v498
      %511 = vmatprep.subr.mxu0 0.0
      %512 = vmatpush1.msra.mxu0 %v499
      %513 = vmatprep.subr.mxu0 0.0
      %514 = vmatpush1.msra.mxu0 %v500
      %515 = vmatprep.subr.mxu0 0.0
      %516 = vmatpush1.msra.mxu0 %v501
      %517 = vmatprep.subr.mxu0 0.0
      %518 = vmatpush1.msra.mxu0 0.0
      %519 = vmatprep.subr.mxu0 0.0
      %520 = vmatpush1.msra.mxu0 0.0
      %521 = vmatprep.subr.mxu0 0.0
      %522 = vmatpush1.msra.mxu0 0.0
      %523 = vmatprep.subr.mxu0 0.0
      %524 = vmatpush1.msra.mxu0 0.0
      %525 = vmatprep.subr.mxu0 0.0
      %526 = vmatpush1.msra.mxu0 0.0
      %527 = vmatprep.subr.mxu0 0.0
      %528 = vmatpush1.msra.mxu0 0.0
      %529 = vmatprep.subr.mxu0 0.0
      %530 = vmatpush1.msra.mxu0 0.0
      %531 = vmatprep.subr.mxu0 0.0
      %532 = vmatpush1.msra.mxu0 0.0
      %533 = vmatprep.subr.mxu0 0.0
      %534 = vmatpush1.msra.mxu0 0.0
      %535 = vmatprep.subr.mxu0 0.0
      %536 = vmatpush1.msra.mxu0 0.0
      %537 = vmatprep.subr.mxu0 0.0
      %538 = vmatpush1.msra.mxu0 0.0
      %539 = vmatprep.subr.mxu0 0.0
      %540 = vmatpush1.msra.mxu0 0.0
      %541 = vmatprep.subr.mxu0 0.0
      %542 = vmatpush1.msra.mxu0 0.0
      %543 = vmatprep.subr.mxu0 0.0
      %544 = vmatpush1.msra.mxu0 0.0
      %545 = vmatprep.subr.mxu0 0.0
      %546 = vmatpush1.msra.mxu0 0.0
      %547 = vmatprep.subr.mxu0 0.0
      %548 = vmatpush1.msra.mxu0 0.0
      %549 = vmatprep.subr.mxu0 0.0
      %550 = vmatpush1.msra.mxu0 0.0
      %551 = vmatprep.subr.mxu0 0.0
      %552 = vmatpush1.msra.mxu0 0.0
      %553 = vmatprep.subr.mxu0 0.0
      %554 = vmatpush1.msra.mxu0 0.0
      %555 = vmatprep.subr.mxu0 0.0
      %556 = vmatpush1.msra.mxu0 0.0
      %557 = vmatprep.subr.mxu0 0.0
      %558 = vmatpush1.msra.mxu0 0.0
      %559 = vmatprep.subr.mxu0 0.0
      %560 = vmatpush1.msra.mxu0 0.0
      %561 = vmatprep.subr.mxu0 0.0
      %562 = vmatpush1.msra.mxu0 0.0
      %563 = vmatprep.subr.mxu0 0.0
      %564 = vmatpush1.msra.mxu0 0.0
      %565 = vmatprep.subr.mxu0 0.0
      %566 = vmatpush1.msra.mxu0 0.0
      %567 = vmatprep.subr.mxu0 0.0
      %568 = vmatpush1.msra.mxu0 0.0
      %569 = vmatprep.subr.mxu0 0.0
      %570 = vmatpush1.msra.mxu0 0.0
      %571 = vmatprep.subr.mxu0 0.0
      %572 = vmatpush1.msra.mxu0 0.0
      %573 = vmatprep.mubr.f32.mxu0 0.0
      %574 = vmatmul.mubr.f32.gmra.mrb[0].mxu0 %v306
      %v575 = vpop.f32.mrb[0].mxu0
      %v576 = vadd.f32 %v507, %v575
      %v577 = vpop.f32.mrb[0].mxu0
      %578 = vmatprep.mubr.f32.mxu0 0.0
      %579 = vmatmul.mubr.f32.gmra.mrb[0].mxu0 %v309
      %v580 = vpop.f32.mrb[0].mxu0
      %v581 = vadd.f32 %v507, %v580
      %v582 = vpop.f32.mrb[0].mxu0
      %583 = vmatprep.mubr.f32.mxu0 0.0
      %584 = vmatmul.mubr.f32.gmra.mrb[0].mxu0 %v312
      %v585 = vpop.f32.mrb[0].mxu0
      %v586 = vadd.f32 %v507, %v585
      %v587 = vpop.f32.mrb[0].mxu0
      %588 = vmatprep.mubr.f32.mxu0 0.0
      %589 = vmatmul.mubr.f32.gmra.mrb[0].mxu0 %v315
      %v590 = vpop.f32.mrb[0].mxu0
      %v591 = vadd.f32 %v507, %v590
      %v592 = vpop.f32.mrb[0].mxu0
      %593 = vmatprep.mubr.f32.mxu0 0.0
      %594 = vmatmul.mubr.f32.gmra.mrb[0].mxu0 %v318
      %v595 = vpop.f32.mrb[0].mxu0
      %v596 = vadd.f32 %v507, %v595
      %v597 = vpop.f32.mrb[0].mxu0
      %598 = vmatprep.mubr.f32.mxu0 0.0
      %599 = vmatmul.mubr.f32.gmra.mrb[0].mxu0 %v321
      %v600 = vpop.f32.mrb[0].mxu0
      %v601 = vadd.f32 %v507, %v600
      %v602 = vpop.f32.mrb[0].mxu0
      %603 = vmatprep.mubr.f32.mxu0 0.0
      %604 = vmatmul.mubr.f32.gmra.mrb[0].mxu0 %v324
      %v605 = vpop.f32.mrb[0].mxu0
      %v606 = vadd.f32 %v507, %v605
      %v607 = vpop.f32.mrb[0].mxu0
      %608 = vmatprep.mubr.f32.mxu0 0.0
      %609 = vmatmul.mubr.f32.gmra.mrb[0].mxu0 %v327
      %v610 = vpop.f32.mrb[0].mxu0
      %v611 = vadd.f32 %v507, %v610
      %v612 = vpop.f32.mrb[0].mxu0
      %613 = vmatprep.mubr.f32.mxu0 0.0
      %614 = vmatmul.mubr.f32.gmra.mrb[0].mxu0 %v330
      %v615 = vpop.f32.mrb[0].mxu0
      %v616 = vadd.f32 %v507, %v615
      %v617 = vpop.f32.mrb[0].mxu0
      %618 = vmatprep.mubr.f32.mxu0 0.0
      %619 = vmatmul.mubr.f32.gmra.mrb[0].mxu0 %v333
      %v620 = vpop.f32.mrb[0].mxu0
      %v621 = vadd.f32 %v507, %v620
      %v622 = vpop.f32.mrb[0].mxu0
      %623 = vmatprep.mubr.f32.mxu0 0.0
      %624 = vmatmul.mubr.f32.gmra.mrb[0].mxu0 %v336
      %v625 = vpop.f32.mrb[0].mxu0
      %v626 = vadd.f32 %v507, %v625
      %v627 = vpop.f32.mrb[0].mxu0
      %628 = vmatprep.mubr.f32.mxu0 0.0
      %629 = vmatmul.mubr.f32.gmra.mrb[0].mxu0 %v339
      %v630 = vpop.f32.mrb[0].mxu0
      %v631 = vadd.f32 %v507, %v630
      %v632 = vpop.f32.mrb[0].mxu0
      %633 = vmatprep.mubr.f32.mxu0 0.0
      %634 = vmatmul.mubr.f32.gmra.mrb[0].mxu0 %v342
      %v635 = vpop.f32.mrb[0].mxu0
      %v636 = vadd.f32 %v507, %v635
      %v637 = vpop.f32.mrb[0].mxu0
      %638 = vmatprep.mubr.f32.mxu0 0.0
      %639 = vmatmul.mubr.f32.gmra.mrb[0].mxu0 %v345
      %v640 = vpop.f32.mrb[0].mxu0
      %v641 = vadd.f32 %v507, %v640
      %v642 = vpop.f32.mrb[0].mxu0
      %643 = vmatprep.mubr.f32.mxu0 0.0
      %644 = vmatmul.mubr.f32.gmra.mrb[0].mxu0 %v348
      %v645 = vpop.f32.mrb[0].mxu0
      %v646 = vadd.f32 %v507, %v645
      %v647 = vpop.f32.mrb[0].mxu0
      %648 = vmatprep.mubr.f32.mxu0 0.0
      %649 = vmatmul.mubr.f32.gmra.mrb[0].mxu0 %v351
      %v650 = vpop.f32.mrb[0].mxu0
      %v651 = vadd.f32 %v507, %v650
      %v652 = vpop.f32.mrb[0].mxu0
      %653 = vdwg.mxu0
      %v654 = vmul.f32 %v576, 0.5
      %v655 = vmul.f32 %v581, 0.5
      %v656 = vmul.f32 %v586, 0.5
      %v657 = vmul.f32 %v591, 0.5
      %v658 = vmul.f32 %v596, 0.5
      %v659 = vmul.f32 %v601, 0.5
      %v660 = vmul.f32 %v606, 0.5
      %v661 = vmul.f32 %v611, 0.5
      %v662 = vmul.f32 %v616, 0.5
      %v663 = vmul.f32 %v621, 0.5
      %v664 = vmul.f32 %v626, 0.5
      %v665 = vmul.f32 %v631, 0.5
      %v666 = vmul.f32 %v636, 0.5
      %v667 = vmul.f32 %v641, 0.5
      %v668 = vmul.f32 %v646, 0.5
      %v669 = vmul.f32 %v651, 0.5
      %v670 = vmul.f32 %v654, 1.442695
      %v671 = vpow.pop %v670
      %v672 = vmul.f32 %v655, 1.442695
      %v673 = vpow.pop %v672
      %v674 = vmul.f32 %v656, 1.442695
      %v675 = vpow.pop %v674
      %v676 = vmul.f32 %v657, 1.442695
      %v677 = vpow.pop %v676
      %v678 = vmul.f32 %v658, 1.442695
      %v679 = vpow.pop %v678
      %v680 = vmul.f32 %v659, 1.442695
      %v681 = vpow.pop %v680
      %v682 = vmul.f32 %v660, 1.442695
      %v683 = vpow.pop %v682
      %v684 = vmul.f32 %v661, 1.442695
      %v685 = vpow.pop %v684
      %v686 = vmul.f32 %v662, 1.442695
      %v687 = vpow.pop %v686
      %v688 = vmul.f32 %v663, 1.442695
      %v689 = vpow.pop %v688
      %v690 = vmul.f32 %v664, 1.442695
      %v691 = vpow.pop %v690
      %v692 = vmul.f32 %v665, 1.442695
      %v693 = vpow.pop %v692
      %v694 = vmul.f32 %v666, 1.442695
      %v695 = vpow.pop %v694
      %v696 = vmul.f32 %v667, 1.442695
      %v697 = vpow.pop %v696
      %v698 = vmul.f32 %v668, 1.442695
      %v699 = vpow.pop %v698
      %v700 = vmul.f32 %v669, 1.442695
      %v701 = vpow.pop %v700
      %v702 = vld [vmem:[%s269] sm:$0xff]
      %v703 = vld [vmem:[%s269 + $0x8] sm:$0xff]
      %v704 = vld [vmem:[%s269 + $0x10] sm:$0xff]
      %v705 = vld [vmem:[%s269 + $0x18] sm:$0xff]
      %v706 = vld [vmem:[%s269 + $0x20] sm:$0xff]
      %v707 = vld [vmem:[%s269 + $0x28] sm:$0xff]
      %v708 = vld [vmem:[%s269 + $0x30] sm:$0xff]
      %v709 = vld [vmem:[%s269 + $0x38] sm:$0xff]
      %v710 = vld [vmem:[%s269 + $0x40] sm:$0xff]
      %v711 = vld [vmem:[%s269 + $0x48] sm:$0xff]
      %v712 = vld [vmem:[%s269 + $0x50] sm:$0xff]
      %v713 = vld [vmem:[%s269 + $0x58] sm:$0xff]
      %v714 = vld [vmem:[%s269 + $0x60] sm:$0xff]
      %v715 = vld [vmem:[%s269 + $0x68] sm:$0xff]
      %v716 = vld [vmem:[%s269 + $0x70] sm:$0xff]
      %v717 = vld [vmem:[%s269 + $0x78] sm:$0xff]
      %v718 = vmul.f32 %v671, %v702
      %v719 = vmul.f32 %v673, %v703
      %v720 = vmul.f32 %v675, %v704
      %v721 = vmul.f32 %v677, %v705
      %v722 = vmul.f32 %v679, %v706
      %v723 = vmul.f32 %v681, %v707
      %v724 = vmul.f32 %v683, %v708
      %v725 = vmul.f32 %v685, %v709
      %v726 = vmul.f32 %v687, %v710
      %v727 = vmul.f32 %v689, %v711
      %v728 = vmul.f32 %v691, %v712
      %v729 = vmul.f32 %v693, %v713
      %v730 = vmul.f32 %v695, %v714
      %v731 = vmul.f32 %v697, %v715
      %v732 = vmul.f32 %v699, %v716
      %v733 = vmul.f32 %v701, %v717
      %v734 = vadd.f32 %v420, %v718
      %v735 = vadd.f32 %v425, %v719
      %v736 = vadd.f32 %v430, %v720
      %v737 = vadd.f32 %v435, %v721
      %v738 = vadd.f32 %v440, %v722
      %v739 = vadd.f32 %v445, %v723
      %v740 = vadd.f32 %v450, %v724
      %v741 = vadd.f32 %v455, %v725
      %v742 = vadd.f32 %v460, %v726
      %v743 = vadd.f32 %v465, %v727
      %v744 = vadd.f32 %v470, %v728
      %v745 = vadd.f32 %v475, %v729
      %v746 = vadd.f32 %v480, %v730
      %v747 = vadd.f32 %v485, %v731
      %v748 = vadd.f32 %v490, %v732
      %v749 = vadd.f32 %v495, %v733
      %vm750 = vcmask 130048
      %751 = vst.msk [vmem:[%s275] sm:$0xff] %vm750, %v734
      %752 = vst.msk [vmem:[%s275 + $0x8] sm:$0xff] %vm750, %v735
      %753 = vst.msk [vmem:[%s275 + $0x10] sm:$0xff] %vm750, %v736
      %754 = vst.msk [vmem:[%s275 + $0x18] sm:$0xff] %vm750, %v737
      %755 = vst.msk [vmem:[%s275 + $0x20] sm:$0xff] %vm750, %v738
      %756 = vst.msk [vmem:[%s275 + $0x28] sm:$0xff] %vm750, %v739
      %757 = vst.msk [vmem:[%s275 + $0x30] sm:$0xff] %vm750, %v740
      %758 = vst.msk [vmem:[%s275 + $0x38] sm:$0xff] %vm750, %v741
      %759 = vst.msk [vmem:[%s275 + $0x40] sm:$0xff] %vm750, %v742
      %760 = vst.msk [vmem:[%s275 + $0x48] sm:$0xff] %vm750, %v743
      %761 = vst.msk [vmem:[%s275 + $0x50] sm:$0xff] %vm750, %v744
      %762 = vst.msk [vmem:[%s275 + $0x58] sm:$0xff] %vm750, %v745
      %763 = vst.msk [vmem:[%s275 + $0x60] sm:$0xff] %vm750, %v746
      %764 = vst.msk [vmem:[%s275 + $0x68] sm:$0xff] %vm750, %v747
      %765 = vst.msk [vmem:[%s275 + $0x70] sm:$0xff] %vm750, %v748
      %766 = vst.msk [vmem:[%s275 + $0x78] sm:$0xff] %vm750, %v749
      %s767 = smul.u32 16, %s17
      %p768 = scmp.lt.s32.totalorder %s767, 127
      %s769 = scalar_select %p768, %s767, 127
      %s770 = smul.addr %s769, 8
      %s771 = scalar_lea.vmem %s6, %s770
      // Predicated region
      $region45: #{tpu_custom_call.1} parent=43 // pred_check
        %p772 = pneg %p171
      $region46: #{tpu_custom_call.1} parent=43 // pred_check_branch
        %774 = sbr.rel (%p772) target = $region48
      $region47: #{tpu_custom_call.1} parent=43 // pred_region
        %s775 = smul.u32 16, %s17
      $region48: #{tpu_custom_call.1} parent=43 // pred_fallthru
        _
    $region44: #{tpu_custom_call.1} parent=5 // pred_fallthru
      _
    %p776 = scmp.le.s32.totalorder 2, %s12
    // Predicated region
    $region49: #{tpu_custom_call.1} parent=5 // pred_check
      %p777 = pneg %p776
    $region50: #{tpu_custom_call.1} parent=5 // pred_check_branch
      %779 = sbr.rel (%p777) target = $region52
    $region51: #{tpu_custom_call.1} parent=5 // pred_region
      %s780 = ssub.s32 %s12, 2
      // Predicated region
      $region53: #{tpu_custom_call.1} parent=51 // pred_check
        %p781 = pneg %p177
      $region54: #{tpu_custom_call.1} parent=51 // pred_check_branch
        %783 = sbr.rel (%p781) target = $region56
      $region55: #{tpu_custom_call.1} parent=51 // pred_region
        %s784 = smul.u32 16, %s18
        %p785 = scmp.lt.s32.totalorder %s784, 127
        %s786 = scalar_select %p785, %s784, 127
        %s787 = smul.addr %s786, 8
        %s788 = scalar_lea.vmem %s6, %s787
      $region56: #{tpu_custom_call.1} parent=51 // pred_fallthru
        _
    $region52: #{tpu_custom_call.1} parent=5 // pred_fallthru
      _
  $region6: #{tpu_custom_call.1} parent=0 // loop_footer
    %s16 = sadd.s32 1, %s12
  $region7: #{tpu_custom_call.1} parent=0 // loop_footer_branch
    %11 = sbr.rel target = $region3
  $region8: #{tpu_custom_call.1} parent=0 // loop_exit
    _

</llo_original>
